<compile_context>
chip_gen: v5e
topology: v5e:2x2
jax: 0.10.0
libtpu: 0.0.40
codegen_flags: <defaults>
</compile_context>

<pallas_src>
import jax
import jax.numpy as jnp
from jax.experimental import pallas as pl
from jax.experimental.pallas import tpu as pltpu

HPAD = 16        # lane width of the fused head slab (9 real columns, rest exactly 0)
ROW_ALIGN = 16   # row alignment (bf16 sublane packing)
NUM_REAL = 9

# real columns inside the (.., HPAD) logits / output slab:
#   0     hydrophobicity (sigmoid)
#   1..3  charge          (softmax)
#   4     size            (sigmoid)
#   5..6  polarity        (softmax)
#   7..8  aromaticity     (softmax)
_SOFTMAX_GROUPS = ((1, 4), (5, 7), (7, 9))   # half-open column ranges


def _cdiv(a, b):
    return (a + b - 1) // b


def _round_up(x, m):
    return _cdiv(x, m) * m


def _aa_property_kernel(x_ref, w1_ref, b1_ref, w2_ref, b2_ref,
                        wh_ref, bh_ref, grp_ref, out_ref):
    # feature_to_property: Linear -> ReLU -> (Dropout = identity) -> Linear -> LayerNorm
    x = x_ref[...]                                                       # (TM, F) bf16
    h1 = jnp.dot(x, w1_ref[...], preferred_element_type=jnp.float32) + b1_ref[...]
    h1 = jnp.maximum(h1, 0.0)                                            # (TM, 2P) f32
    h2 = jnp.dot(h1.astype(jnp.bfloat16), w2_ref[...],
                 preferred_element_type=jnp.float32) + b2_ref[...]       # (TM, P) f32

    # LayerNorm in f32 (gamma/beta already folded into wh/bh at init)
    mu = jnp.mean(h2, axis=-1, keepdims=True)
    var = jnp.mean((h2 - mu) * (h2 - mu), axis=-1, keepdims=True)        # biased, eps=1e-5
    pf = (h2 - mu) * jax.lax.rsqrt(var + 1e-5)                           # (TM, P) f32

    # fused 5-head projection -> (TM, HPAD) f32 logits (cols 9.. are exactly 0)
    logits = jnp.dot(pf.astype(jnp.bfloat16), wh_ref[...],
                     preferred_element_type=jnp.float32) + bh_ref[...]

    col = jax.lax.broadcasted_iota(jnp.int32, logits.shape, 1)
    sig = (col == 0) | (col == 4)
    g1 = (col >= 1) & (col <= 3)
    g2 = (col >= 5) & (col <= 6)
    g3 = (col >= 7) & (col <= 8)
    smax = g1 | g2 | g3
    valid = col < NUM_REAL

    # per-group max for softmax stability, assembled per lane
    neg = jnp.float32(-1e30)
    m1 = jnp.max(jnp.where(g1, logits, neg), axis=-1, keepdims=True)
    m2 = jnp.max(jnp.where(g2, logits, neg), axis=-1, keepdims=True)
    m3 = jnp.max(jnp.where(g3, logits, neg), axis=-1, keepdims=True)
    gmax = jnp.where(g1, m1, jnp.where(g2, m2, jnp.where(g3, m3, 0.0)))

    # single EUP exp over the slab; sigmoid(x) = 1 / (1 + exp(-x)) shares it
    e = jnp.exp(jnp.where(sig, -logits, logits - gmax))
    e_grp = jnp.where(smax, e, 0.0)
    # per-lane softmax denominators via a tiny MXU matmul against the constant
    # 0/1 group-indicator matrix (replaces three masked XLU sums)
    denom = jnp.dot(e_grp, grp_ref[...], preferred_element_type=jnp.float32)
    denom = denom + jnp.where(sig, 1.0 + e, 0.0)          # sigmoid lanes: 1 + exp(-x)
    numer = jnp.where(sig, 1.0, e)
    # exact division (not approx reciprocal) so softmax groups sum to 1 in f32
    out = jnp.where(valid, numer / jnp.where(valid, denom, 1.0), 0.0)

    out_ref[...] = out                                                   # (TM, 16) f32


def init_params(key, feature_dim, property_dim=64):
    P = property_dim
    ks = jax.random.split(key, 6)
    s = 0.05
    w1 = jax.random.normal(ks[0], (feature_dim, 2 * P), jnp.float32) * s
    b1 = jax.random.normal(ks[1], (1, 2 * P), jnp.float32) * s
    w2 = jax.random.normal(ks[2], (2 * P, P), jnp.float32) * s
    b2 = jax.random.normal(ks[3], (1, P), jnp.float32) * s
    gamma = jnp.ones((P,), jnp.float32)      # LayerNorm weight (torch init)
    beta = jnp.zeros((P,), jnp.float32)      # LayerNorm bias
    wh = jax.random.normal(ks[4], (P, NUM_REAL), jnp.float32) * s
    bh = jax.random.normal(ks[5], (1, NUM_REAL), jnp.float32) * s

    # Fold LayerNorm affine into the fused head:
    #   ((h-mu)*rsqrt(var+eps)*gamma + beta) @ wh + bh
    # = (h-mu)*rsqrt(var+eps) @ (gamma[:,None]*wh) + (beta @ wh + bh)
    wh_f = gamma[:, None] * wh
    bh_f = beta[None, :] @ wh + bh

    wh_pad = jnp.zeros((P, HPAD), jnp.float32).at[:, :NUM_REAL].set(wh_f)
    bh_pad = jnp.zeros((1, HPAD), jnp.float32).at[:, :NUM_REAL].set(bh_f)

    # constant softmax group-indicator matrix (HPAD x HPAD)
    grp = jnp.zeros((HPAD, HPAD), jnp.float32)
    for lo, hi in _SOFTMAX_GROUPS:
        grp = grp.at[lo:hi, lo:hi].set(1.0)

    # TODO(synk): nn.Embedding `aa_embeddings` is never used in forward and
    # Dropout(0.1) is identity in eval mode -> neither is materialized here.
    return dict(
        w1=w1.astype(jnp.bfloat16), b1=b1,
        w2=w2.astype(jnp.bfloat16), b2=b2,
        wh=wh_pad.astype(jnp.bfloat16), bh=bh_pad,
        grp=grp,
    )


def amino_acid_property_mapper(features, params, sequences=None, row_tile=1024):
    """features: [B, S, F] float32. `sequences` accepted for API parity; never read."""
    B, S, F = features.shape
    P2 = params["w1"].shape[1]   # 2 * property_dim
    P = params["w2"].shape[1]    # property_dim

    # flatten (B, S) into rows; pad rows only to the bf16 packing multiple
    N = B * S
    N_pad = _round_up(N, ROW_ALIGN)
    # Megacore-aware tile: cap so large N yields >= 2 "parallel" tiles (v7x 2nd TC);
    # last block may be partial (cdiv grid) so no junk-row DMA/compute.
    TM = min(row_tile, max(ROW_ALIGN, _round_up(_cdiv(N_pad, 2), ROW_ALIGN)))
    num_tiles = _cdiv(N_pad, TM)

    x = features.reshape(N, F).astype(jnp.bfloat16)
    if N_pad != N:
        x = jnp.pad(x, ((0, N_pad - N), (0, 0)))

    flops = 2 * N_pad * (F * P2 + P2 * P + P * HPAD + HPAD * HPAD)
    bytes_accessed = (2 * (N_pad * F + F * P2 + P2 * P + P * HPAD)       # bf16 inputs
                      + 4 * (N_pad * HPAD + P2 + P + HPAD + HPAD * HPAD))  # f32 out + biases
    cost = pl.CostEstimate(flops=flops,
                           transcendentals=N_pad * (2 * HPAD + 1),
                           bytes_accessed=bytes_accessed)

    grid_spec = pltpu.PrefetchScalarGridSpec(
        num_scalar_prefetch=0,
        grid=(num_tiles,),
        in_specs=[
            pl.BlockSpec((TM, F), lambda i: (i, 0)),        # x row tile (bf16, no lane pad)
            pl.BlockSpec((F, P2), lambda i: (0, 0)),        # w1 (bf16)
            pl.BlockSpec((1, P2), lambda i: (0, 0)),        # b1 (f32)
            pl.BlockSpec((P2, P), lambda i: (0, 0)),        # w2 (bf16)
            pl.BlockSpec((1, P), lambda i: (0, 0)),         # b2 (f32)
            pl.BlockSpec((P, HPAD), lambda i: (0, 0)),      # fused head W (gamma folded, bf16)
            pl.BlockSpec((1, HPAD), lambda i: (0, 0)),      # fused head b (beta folded, f32)
            pl.BlockSpec((HPAD, HPAD), lambda i: (0, 0)),   # softmax group indicator (f32)
        ],
        out_specs=pl.BlockSpec((TM, HPAD), lambda i: (i, 0)),   # narrow 16-lane f32 slab
    )

    slab = pl.pallas_call(
        _aa_property_kernel,
        out_shape=jax.ShapeDtypeStruct((N_pad, HPAD), jnp.float32),
        grid_spec=grid_spec,
        compiler_params=pltpu.CompilerParams(dimension_semantics=("parallel",)),
        cost_estimate=cost,
    )(x, params["w1"], params["b1"], params["w2"], params["b2"],
      params["wh"], params["bh"], params["grp"])

    slab = slab[:N].reshape(B, S, HPAD)
    hydro = slab[..., 0:1]
    charge = slab[..., 1:4]
    size = slab[..., 4:5]
    pol = slab[..., 5:7]
    arom = slab[..., 7:9]

    # conservation statistics on the wrapper side (plain XLA on small arrays)
    # TODO(synk): unbiased variance (torch.var default) requires S >= 2; S == 1 -> nan.
    hydro_var = jnp.var(hydro, axis=1, ddof=1)                                 # [B, 1]
    charge_entropy = -(charge * jnp.log(charge + 1e-8)).sum(-1).mean(axis=1)   # [B]
    # reproduce the PyTorch broadcasting exactly: [B,1] + [B] -> [B,B]
    cons_bb = 1.0 - (hydro_var + charge_entropy) / 2.0
    conservation = jnp.broadcast_to(cons_bb[:, None, :], (B, S, cons_bb.shape[1]))

    return {
        "hydrophobicity": hydro,
        "charge": charge,
        "size": size,
        "polarity": pol,
        "aromaticity": arom,
        "conservation": conservation,
    }


if __name__ == "__main__":
    B, S, FEATURE_DIM, PROPERTY_DIM = 2, 8, 32, 64

    key = jax.random.PRNGKey(0)
    k_feat, k_param = jax.random.split(key)
    features = jax.random.normal(k_feat, (B, S, FEATURE_DIM), jnp.float32)
    params = init_params(k_param, FEATURE_DIM, PROPERTY_DIM)
    sequences = ["ACDEFGHK", "LMNPQRST"]   # unused by the math, kept for API parity

    preds = amino_acid_property_mapper(features, params, sequences)
    preds = jax.block_until_ready(preds)

    # shape sanity checks
    assert preds["hydrophobicity"].shape == (B, S, 1)
    assert preds["charge"].shape == (B, S, 3)
    assert preds["size"].shape == (B, S, 1)
    assert preds["polarity"].shape == (B, S, 2)
    assert preds["aromaticity"].shape == (B, S, 2)
    assert preds["conservation"].shape == (B, S, B)

    # softmax groups sum to 1 (exact division in-kernel -> tight tolerance)
    assert jnp.allclose(preds["charge"].sum(-1), 1.0, atol=1e-3)
    assert jnp.allclose(preds["polarity"].sum(-1), 1.0, atol=1e-3)
    assert jnp.allclose(preds["aromaticity"].sum(-1), 1.0, atol=1e-3)
    # sigmoids strictly in (0, 1)
    assert bool(jnp.all((preds["hydrophobicity"] > 0) & (preds["hydrophobicity"] < 1)))
    assert bool(jnp.all((preds["size"] > 0) & (preds["size"] < 1)))

    print("KERNEL_OK")
</pallas_src>

<mosaic_0001>
module attributes {stable_mosaic.version = 11 : i64} {
  func.func @_aa_property_kernel(%arg0: i32, %arg1: memref<16x32xbf16, #tpu.memory_space<vmem>>, %arg2: memref<32x128xbf16, #tpu.memory_space<vmem>>, %arg3: memref<1x128xf32, #tpu.memory_space<vmem>>, %arg4: memref<128x64xbf16, #tpu.memory_space<vmem>>, %arg5: memref<1x64xf32, #tpu.memory_space<vmem>>, %arg6: memref<64x16xbf16, #tpu.memory_space<vmem>>, %arg7: memref<1x16xf32, #tpu.memory_space<vmem>>, %arg8: memref<16x16xf32, #tpu.memory_space<vmem>>, %arg9: memref<16x16xf32, #tpu.memory_space<vmem>>) attributes {dimension_semantics = [#tpu.dimension_semantics<parallel>], iteration_bounds = array<i64: 1>, scalar_prefetch = 0 : i64, scratch_operands = 0 : i64, tpu.core_type = #tpu.core_type<tc>, window_params = [{transform_indices = @transform_0, window_bounds = array<i64: 16, 32>}, {pipeline_mode = #tpu.pipeline_mode<synchronous>, transform_indices = @transform_1, window_bounds = array<i64: 32, 128>}, {pipeline_mode = #tpu.pipeline_mode<synchronous>, transform_indices = @transform_2, window_bounds = array<i64: 1, 128>}, {pipeline_mode = #tpu.pipeline_mode<synchronous>, transform_indices = @transform_3, window_bounds = array<i64: 128, 64>}, {pipeline_mode = #tpu.pipeline_mode<synchronous>, transform_indices = @transform_4, window_bounds = array<i64: 1, 64>}, {pipeline_mode = #tpu.pipeline_mode<synchronous>, transform_indices = @transform_5, window_bounds = array<i64: 64, 16>}, {pipeline_mode = #tpu.pipeline_mode<synchronous>, transform_indices = @transform_6, window_bounds = array<i64: 1, 16>}, {pipeline_mode = #tpu.pipeline_mode<synchronous>, transform_indices = @transform_7, window_bounds = array<i64: 16, 16>}, {transform_indices = @transform_8, window_bounds = array<i64: 16, 16>}]} {
    %c0 = arith.constant 0 : index
    %c0_0 = arith.constant 0 : index
    %0 = vector.load %arg1[%c0, %c0_0] : memref<16x32xbf16, #tpu.memory_space<vmem>>, vector<16x32xbf16>
    %c0_1 = arith.constant 0 : index
    %c0_2 = arith.constant 0 : index
    %1 = vector.load %arg2[%c0_1, %c0_2] : memref<32x128xbf16, #tpu.memory_space<vmem>>, vector<32x128xbf16>
    %cst = arith.constant dense<0.000000e+00> : vector<16x128xf32>
    %2 = tpu.matmul %0, %1, %cst {dimension_numbers = #tpu.dot_dimension_numbers<[1], [0], [0], [1], [0, 0, 1, 1], [], []>} : vector<16x32xbf16>, vector<32x128xbf16>, vector<16x128xf32> -> vector<16x128xf32>
    %c0_3 = arith.constant 0 : index
    %c0_4 = arith.constant 0 : index
    %3 = vector.load %arg3[%c0_3, %c0_4] : memref<1x128xf32, #tpu.memory_space<vmem>>, vector<1x128xf32>
    %4 = vector.broadcast %3 : vector<1x128xf32> to vector<16x128xf32>
    %5 = arith.addf %2, %4 : vector<16x128xf32>
    %cst_5 = arith.constant 0.000000e+00 : f32
    %6 = vector.broadcast %cst_5 : f32 to vector<16x128xf32>
    %7 = arith.maximumf %5, %6 : vector<16x128xf32>
    %8 = arith.truncf %7 : vector<16x128xf32> to vector<16x128xbf16>
    %c0_6 = arith.constant 0 : index
    %c0_7 = arith.constant 0 : index
    %9 = vector.load %arg4[%c0_6, %c0_7] : memref<128x64xbf16, #tpu.memory_space<vmem>>, vector<128x64xbf16>
    %cst_8 = arith.constant dense<0.000000e+00> : vector<16x64xf32>
    %10 = tpu.matmul %8, %9, %cst_8 {dimension_numbers = #tpu.dot_dimension_numbers<[1], [0], [0], [1], [0, 0, 1, 1], [], []>} : vector<16x128xbf16>, vector<128x64xbf16>, vector<16x64xf32> -> vector<16x64xf32>
    %c0_9 = arith.constant 0 : index
    %c0_10 = arith.constant 0 : index
    %11 = vector.load %arg5[%c0_9, %c0_10] : memref<1x64xf32, #tpu.memory_space<vmem>>, vector<1x64xf32>
    %12 = vector.broadcast %11 : vector<1x64xf32> to vector<16x64xf32>
    %13 = arith.addf %10, %12 : vector<16x64xf32>
    %cst_11 = arith.constant dense<0.000000e+00> : vector<16xf32>
    %14 = vector.multi_reduction <add>, %13, %cst_11 [1] : vector<16x64xf32> to vector<16xf32>
    %15 = vector.shape_cast %14 : vector<16xf32> to vector<16x1xf32>
    %cst_12 = arith.constant 6.400000e+01 : f32
    %16 = vector.broadcast %cst_12 : f32 to vector<16x1xf32>
    %17 = arith.divf %15, %16 : vector<16x1xf32>
    %18 = vector.broadcast %17 : vector<16x1xf32> to vector<16x64xf32>
    %19 = arith.subf %13, %18 : vector<16x64xf32>
    %20 = vector.broadcast %17 : vector<16x1xf32> to vector<16x64xf32>
    %21 = arith.subf %13, %20 : vector<16x64xf32>
    %22 = arith.mulf %19, %21 : vector<16x64xf32>
    %cst_13 = arith.constant dense<0.000000e+00> : vector<16xf32>
    %23 = vector.multi_reduction <add>, %22, %cst_13 [1] : vector<16x64xf32> to vector<16xf32>
    %24 = vector.shape_cast %23 : vector<16xf32> to vector<16x1xf32>
    %cst_14 = arith.constant 6.400000e+01 : f32
    %25 = vector.broadcast %cst_14 : f32 to vector<16x1xf32>
    %26 = arith.divf %24, %25 : vector<16x1xf32>
    %27 = vector.broadcast %17 : vector<16x1xf32> to vector<16x64xf32>
    %28 = arith.subf %13, %27 : vector<16x64xf32>
    %cst_15 = arith.constant 9.99999974E-6 : f32
    %29 = vector.broadcast %cst_15 : f32 to vector<16x1xf32>
    %30 = arith.addf %26, %29 : vector<16x1xf32>
    %31 = math.rsqrt %30 : vector<16x1xf32>
    %32 = vector.broadcast %31 : vector<16x1xf32> to vector<16x64xf32>
    %33 = arith.mulf %28, %32 : vector<16x64xf32>
    %34 = arith.truncf %33 : vector<16x64xf32> to vector<16x64xbf16>
    %c0_16 = arith.constant 0 : index
    %c0_17 = arith.constant 0 : index
    %35 = vector.load %arg6[%c0_16, %c0_17] : memref<64x16xbf16, #tpu.memory_space<vmem>>, vector<64x16xbf16>
    %cst_18 = arith.constant dense<0.000000e+00> : vector<16x16xf32>
    %36 = tpu.matmul %34, %35, %cst_18 {dimension_numbers = #tpu.dot_dimension_numbers<[1], [0], [0], [1], [0, 0, 1, 1], [], []>} : vector<16x64xbf16>, vector<64x16xbf16>, vector<16x16xf32> -> vector<16x16xf32>
    %c0_19 = arith.constant 0 : index
    %c0_20 = arith.constant 0 : index
    %37 = vector.load %arg7[%c0_19, %c0_20] : memref<1x16xf32, #tpu.memory_space<vmem>>, vector<1x16xf32>
    %38 = vector.broadcast %37 : vector<1x16xf32> to vector<16x16xf32>
    %39 = arith.addf %36, %38 : vector<16x16xf32>
    %40 = tpu.iota {dimensions = array<i32: 1>} : vector<16x16xi32>
    %c0_i32 = arith.constant 0 : i32
    %41 = vector.broadcast %c0_i32 : i32 to vector<16x16xi32>
    %42 = arith.cmpi eq, %40, %41 : vector<16x16xi32>
    %c4_i32 = arith.constant 4 : i32
    %43 = vector.broadcast %c4_i32 : i32 to vector<16x16xi32>
    %44 = arith.cmpi eq, %40, %43 : vector<16x16xi32>
    %45 = arith.ori %42, %44 : vector<16x16xi1>
    %c1_i32 = arith.constant 1 : i32
    %46 = vector.broadcast %c1_i32 : i32 to vector<16x16xi32>
    %47 = arith.cmpi sge, %40, %46 : vector<16x16xi32>
    %c3_i32 = arith.constant 3 : i32
    %48 = vector.broadcast %c3_i32 : i32 to vector<16x16xi32>
    %49 = arith.cmpi sle, %40, %48 : vector<16x16xi32>
    %50 = arith.andi %47, %49 : vector<16x16xi1>
    %c5_i32 = arith.constant 5 : i32
    %51 = vector.broadcast %c5_i32 : i32 to vector<16x16xi32>
    %52 = arith.cmpi sge, %40, %51 : vector<16x16xi32>
    %c6_i32 = arith.constant 6 : i32
    %53 = vector.broadcast %c6_i32 : i32 to vector<16x16xi32>
    %54 = arith.cmpi sle, %40, %53 : vector<16x16xi32>
    %55 = arith.andi %52, %54 : vector<16x16xi1>
    %c7_i32 = arith.constant 7 : i32
    %56 = vector.broadcast %c7_i32 : i32 to vector<16x16xi32>
    %57 = arith.cmpi sge, %40, %56 : vector<16x16xi32>
    %c8_i32 = arith.constant 8 : i32
    %58 = vector.broadcast %c8_i32 : i32 to vector<16x16xi32>
    %59 = arith.cmpi sle, %40, %58 : vector<16x16xi32>
    %60 = arith.andi %57, %59 : vector<16x16xi1>
    %61 = arith.ori %50, %55 : vector<16x16xi1>
    %62 = arith.ori %61, %60 : vector<16x16xi1>
    %c9_i32 = arith.constant 9 : i32
    %63 = vector.broadcast %c9_i32 : i32 to vector<16x16xi32>
    %64 = arith.cmpi slt, %40, %63 : vector<16x16xi32>
    %cst_21 = arith.constant -1.000000e+30 : f32
    %65 = vector.broadcast %cst_21 : f32 to vector<16x16xf32>
    %66 = arith.select %50, %39, %65 : vector<16x16xi1>, vector<16x16xf32>
    %cst_22 = arith.constant dense<0xFF800000> : vector<16xf32>
    %67 = vector.multi_reduction <maximumf>, %66, %cst_22 [1] : vector<16x16xf32> to vector<16xf32>
    %68 = vector.shape_cast %67 : vector<16xf32> to vector<16x1xf32>
    %cst_23 = arith.constant -1.000000e+30 : f32
    %69 = vector.broadcast %cst_23 : f32 to vector<16x16xf32>
    %70 = arith.select %55, %39, %69 : vector<16x16xi1>, vector<16x16xf32>
    %cst_24 = arith.constant dense<0xFF800000> : vector<16xf32>
    %71 = vector.multi_reduction <maximumf>, %70, %cst_24 [1] : vector<16x16xf32> to vector<16xf32>
    %72 = vector.shape_cast %71 : vector<16xf32> to vector<16x1xf32>
    %cst_25 = arith.constant -1.000000e+30 : f32
    %73 = vector.broadcast %cst_25 : f32 to vector<16x16xf32>
    %74 = arith.select %60, %39, %73 : vector<16x16xi1>, vector<16x16xf32>
    %cst_26 = arith.constant dense<0xFF800000> : vector<16xf32>
    %75 = vector.multi_reduction <maximumf>, %74, %cst_26 [1] : vector<16x16xf32> to vector<16xf32>
    %76 = vector.shape_cast %75 : vector<16xf32> to vector<16x1xf32>
    %cst_27 = arith.constant 0.000000e+00 : f32
    %77 = vector.shape_cast %76 : vector<16x1xf32> to vector<16x1xf32>
    %78 = vector.broadcast %77 : vector<16x1xf32> to vector<16x16xf32>
    %79 = vector.broadcast %cst_27 : f32 to vector<16x16xf32>
    %80 = arith.select %60, %78, %79 : vector<16x16xi1>, vector<16x16xf32>
    %81 = vector.shape_cast %72 : vector<16x1xf32> to vector<16x1xf32>
    %82 = vector.broadcast %81 : vector<16x1xf32> to vector<16x16xf32>
    %83 = arith.select %55, %82, %80 : vector<16x16xi1>, vector<16x16xf32>
    %84 = vector.shape_cast %68 : vector<16x1xf32> to vector<16x1xf32>
    %85 = vector.broadcast %84 : vector<16x1xf32> to vector<16x16xf32>
    %86 = arith.select %50, %85, %83 : vector<16x16xi1>, vector<16x16xf32>
    %cst_28 = arith.constant 0.000000e+00 : f32
    %87 = vector.broadcast %cst_28 : f32 to vector<16x16xf32>
    %88 = arith.subf %87, %39 : vector<16x16xf32>
    %89 = arith.subf %39, %86 : vector<16x16xf32>
    %90 = arith.select %45, %88, %89 : vector<16x16xi1>, vector<16x16xf32>
    %91 = math.exp %90 : vector<16x16xf32>
    %cst_29 = arith.constant 0.000000e+00 : f32
    %92 = vector.broadcast %cst_29 : f32 to vector<16x16xf32>
    %93 = arith.select %62, %91, %92 : vector<16x16xi1>, vector<16x16xf32>
    %c0_30 = arith.constant 0 : index
    %c0_31 = arith.constant 0 : index
    %94 = vector.load %arg8[%c0_30, %c0_31] : memref<16x16xf32, #tpu.memory_space<vmem>>, vector<16x16xf32>
    %cst_32 = arith.constant dense<0.000000e+00> : vector<16x16xf32>
    %95 = tpu.matmul %93, %94, %cst_32 {dimension_numbers = #tpu.dot_dimension_numbers<[1], [0], [0], [1], [0, 0, 1, 1], [], []>} : vector<16x16xf32>, vector<16x16xf32>, vector<16x16xf32> -> vector<16x16xf32>
    %cst_33 = arith.constant 1.000000e+00 : f32
    %96 = vector.broadcast %cst_33 : f32 to vector<16x16xf32>
    %97 = arith.addf %96, %91 : vector<16x16xf32>
    %cst_34 = arith.constant 0.000000e+00 : f32
    %98 = vector.broadcast %cst_34 : f32 to vector<16x16xf32>
    %99 = arith.select %45, %97, %98 : vector<16x16xi1>, vector<16x16xf32>
    %100 = arith.addf %95, %99 : vector<16x16xf32>
    %cst_35 = arith.constant 1.000000e+00 : f32
    %101 = vector.broadcast %cst_35 : f32 to vector<16x16xf32>
    %102 = arith.select %45, %101, %91 : vector<16x16xi1>, vector<16x16xf32>
    %cst_36 = arith.constant 1.000000e+00 : f32
    %103 = vector.broadcast %cst_36 : f32 to vector<16x16xf32>
    %104 = arith.select %64, %100, %103 : vector<16x16xi1>, vector<16x16xf32>
    %105 = arith.divf %102, %104 : vector<16x16xf32>
    %cst_37 = arith.constant 0.000000e+00 : f32
    %106 = vector.broadcast %cst_37 : f32 to vector<16x16xf32>
    %107 = arith.select %64, %105, %106 : vector<16x16xi1>, vector<16x16xf32>
    %c0_38 = arith.constant 0 : index
    %c0_39 = arith.constant 0 : index
    %108 = vector.load %arg9[%c0_38, %c0_39] : memref<16x16xf32, #tpu.memory_space<vmem>>, vector<16x16xf32>
    tpu.vector_store %arg9[%c0_38, %c0_39], %107 {strides = array<i32>} : memref<16x16xf32, #tpu.memory_space<vmem>>, vector<16x16xf32>,
    return
  }
  func.func @transform_0(%arg0: i32) -> (i32, i32) {
    %c0_i32 = arith.constant 0 : i32
    %c0_i32_0 = arith.constant 0 : i32
    return %arg0, %c0_i32 : i32, i32
  }
  func.func @transform_1(%arg0: i32) -> (i32, i32) {
    %c0_i32 = arith.constant 0 : i32
    %c0_i32_0 = arith.constant 0 : i32
    %c0_i32_1 = arith.constant 0 : i32
    return %c0_i32, %c0_i32_0 : i32, i32
  }
  func.func @transform_2(%arg0: i32) -> (i32, i32) {
    %c0_i32 = arith.constant 0 : i32
    %c0_i32_0 = arith.constant 0 : i32
    %c0_i32_1 = arith.constant 0 : i32
    return %c0_i32, %c0_i32_0 : i32, i32
  }
  func.func @transform_3(%arg0: i32) -> (i32, i32) {
    %c0_i32 = arith.constant 0 : i32
    %c0_i32_0 = arith.constant 0 : i32
    %c0_i32_1 = arith.constant 0 : i32
    return %c0_i32, %c0_i32_0 : i32, i32
  }
  func.func @transform_4(%arg0: i32) -> (i32, i32) {
    %c0_i32 = arith.constant 0 : i32
    %c0_i32_0 = arith.constant 0 : i32
    %c0_i32_1 = arith.constant 0 : i32
    return %c0_i32, %c0_i32_0 : i32, i32
  }
  func.func @transform_5(%arg0: i32) -> (i32, i32) {
    %c0_i32 = arith.constant 0 : i32
    %c0_i32_0 = arith.constant 0 : i32
    %c0_i32_1 = arith.constant 0 : i32
    return %c0_i32, %c0_i32_0 : i32, i32
  }
  func.func @transform_6(%arg0: i32) -> (i32, i32) {
    %c0_i32 = arith.constant 0 : i32
    %c0_i32_0 = arith.constant 0 : i32
    %c0_i32_1 = arith.constant 0 : i32
    return %c0_i32, %c0_i32_0 : i32, i32
  }
  func.func @transform_7(%arg0: i32) -> (i32, i32) {
    %c0_i32 = arith.constant 0 : i32
    %c0_i32_0 = arith.constant 0 : i32
    %c0_i32_1 = arith.constant 0 : i32
    return %c0_i32, %c0_i32_0 : i32, i32
  }
  func.func @transform_8(%arg0: i32) -> (i32, i32) {
    %c0_i32 = arith.constant 0 : i32
    %c0_i32_0 = arith.constant 0 : i32
    return %arg0, %c0_i32 : i32, i32
  }
}

</mosaic_0001>

<llo_original>
// kernel: tpu_custom_call.1
$region0: #{tpu_custom_call.1}
  #allocation0 [shape = 'u32[]', space=smem, size = 0x4, offset = 0x4, fixed_abs, tag = 'smem constant byte address 0x4 - core index']
  #allocation1 [shape = 'u32[72,128]{1,0:T(1,128)}', space=vmem, size = 0x9000, scoped, tag = 'internal scratch']
  %s0 = inlined_call_operand.vmem [shape: bf16[16,32], index: 0, kind: input, shape index: {}]
  %s1 = inlined_call_operand.vmem [shape: bf16[32,128], index: 1, kind: input, shape index: {}]
  %s2 = inlined_call_operand.vmem [shape: f32[1,128], index: 2, kind: input, shape index: {}]
  %s3 = inlined_call_operand.vmem [shape: bf16[128,64], index: 3, kind: input, shape index: {}]
  %s4 = inlined_call_operand.vmem [shape: f32[1,64], index: 4, kind: input, shape index: {}]
  %s5 = inlined_call_operand.vmem [shape: bf16[64,16], index: 5, kind: input, shape index: {}]
  %s6 = inlined_call_operand.vmem [shape: f32[1,16], index: 6, kind: input, shape index: {}]
  %s7 = inlined_call_operand.vmem [shape: f32[16,16], index: 7, kind: input, shape index: {}]
  %s8 = inlined_call_operand.hbm [shape: f32[16,16], index: 8, kind: output, shape index: {}]
  %s9 = sld [smem:[#allocation0]]
  $region42: #{tpu_custom_call.1} parent=0
    _
  %s11 = ssub.s32 1, %s9
  %s12 = scalar_select 0, %s11, %s9
  $region1: #{tpu_custom_call.1} parent=0
    #allocation2 [shape = 'u8[8192]{0}', space=vmem, size = 0x2000, scoped, tag = 'output window, operand 0, single buffered']
    #allocation3 [shape = 's32[1]{0}', space=sflag, size = 0x4, scoped, tag = 'scoped memory for tpu_custom_call.1']
    %13 = vsyncpa [#allocation3], 0
    // Predicated region
    $region2: #{tpu_custom_call.1} parent=1 // pred_check
      _
    $region3: #{tpu_custom_call.1} parent=1 // pred_check_branch
      %15 = sbr.rel (0) target = $region5
    $region4: #{tpu_custom_call.1} parent=1 // pred_region
      _
    $region5: #{tpu_custom_call.1} parent=1 // pred_fallthru
      _
    // Predicated region
    $region6: #{tpu_custom_call.1} parent=1 // pred_check
      _
    $region7: #{tpu_custom_call.1} parent=1 // pred_check_branch
      %17 = sbr.rel (0) target = $region9
    $region8: #{tpu_custom_call.1} parent=1 // pred_region
      _
    $region9: #{tpu_custom_call.1} parent=1 // pred_fallthru
      _
    // Predicated region
    $region10: #{tpu_custom_call.1} parent=1 // pred_check
      _
    $region11: #{tpu_custom_call.1} parent=1 // pred_check_branch
      %19 = sbr.rel (0) target = $region13
    $region12: #{tpu_custom_call.1} parent=1 // pred_region
      _
    $region13: #{tpu_custom_call.1} parent=1 // pred_fallthru
      _
    // Predicated region
    $region14: #{tpu_custom_call.1} parent=1 // pred_check
      _
    $region15: #{tpu_custom_call.1} parent=1 // pred_check_branch
      %21 = sbr.rel (0) target = $region17
    $region16: #{tpu_custom_call.1} parent=1 // pred_region
      _
    $region17: #{tpu_custom_call.1} parent=1 // pred_fallthru
      _
    // Predicated region
    $region18: #{tpu_custom_call.1} parent=1 // pred_check
      _
    $region19: #{tpu_custom_call.1} parent=1 // pred_check_branch
      %23 = sbr.rel (0) target = $region21
    $region20: #{tpu_custom_call.1} parent=1 // pred_region
      _
    $region21: #{tpu_custom_call.1} parent=1 // pred_fallthru
      _
    // Predicated region
    $region22: #{tpu_custom_call.1} parent=1 // pred_check
      _
    $region23: #{tpu_custom_call.1} parent=1 // pred_check_branch
      %25 = sbr.rel (0) target = $region25
    $region24: #{tpu_custom_call.1} parent=1 // pred_region
      _
    $region25: #{tpu_custom_call.1} parent=1 // pred_fallthru
      _
    // Predicated region
    $region26: #{tpu_custom_call.1} parent=1 // pred_check
      _
    $region27: #{tpu_custom_call.1} parent=1 // pred_check_branch
      %27 = sbr.rel (0) target = $region29
    $region28: #{tpu_custom_call.1} parent=1 // pred_region
      _
    $region29: #{tpu_custom_call.1} parent=1 // pred_fallthru
      _
    // Predicated region
    $region30: #{tpu_custom_call.1} parent=1 // pred_check
      _
    $region31: #{tpu_custom_call.1} parent=1 // pred_check_branch
      %29 = sbr.rel (0) target = $region33
    $region32: #{tpu_custom_call.1} parent=1 // pred_region
      _
    $region33: #{tpu_custom_call.1} parent=1 // pred_fallthru
      _
    %v31 = vld [vmem:[%s0] sm:$0xf]
    %v32 = vld [vmem:[%s0 + $0x4] sm:$0xf]
    %v33 = vld [vmem:[%s1] sm:$0xf]
    %v34 = vld [vmem:[%s1 + $0x4] sm:$0xf]
    %v35 = vld [vmem:[%s1 + $0x8] sm:$0xf]
    %v36 = vld [vmem:[%s1 + $0xc] sm:$0xf]
    %v37 = vld [vmem:[%s2] sm:$0x1]
    %v39 = vperm.slane %v37, 0
    %v43 = vunpack.c.l.b16 %v31
    %v44 = vunpack.c.l.b16 %v32
    %v45 = vpack.c.b16 %v44, %v43
    %v50 = vunpack.c.l.b16 %v33
    %v51 = vunpack.c.l.b16 %v34
    %v52 = vunpack.c.l.b16 %v35
    %v53 = vunpack.c.l.b16 %v36
    %v54 = vpack.c.b16 %v51, %v50
    %v55 = vpack.c.b16 %v53, %v52
    %vm58 = vcmask 261120
    %v60 = vsel %vm58, %v45, 0
    %62 = vmatpush.bf16.msra.mxu0 0
    %63 = vmatpush.bf16.msra.mxu0 0
    %64 = vmatpush.bf16.msra.mxu0 0
    %65 = vmatpush.bf16.msra.mxu0 0
    %66 = vmatpush.bf16.msra.mxu0 0
    %67 = vmatpush.bf16.msra.mxu0 0
    %68 = vmatpush.bf16.msra.mxu0 %v55
    %69 = vmatpush.bf16.msra.mxu0 %v54
    %70 = vmatmul.bf16.gmra.mxu0 %v60
    %v71 = vpop.f32.mrf.mxu0
    %v72 = vadd.f32 %v39, %v71
    %v73 = vpop.f32.mrf.mxu0
    %v74 = vadd.f32 %v39, %v73
    %75 = vdwg.mxu0
    %v76 = vmax.f32 %v72, 0.0
    %v77 = vmax.f32 %v74, 0.0
    %v78 = vpack.c.bf16 %v77, %v76
    %v79 = vld [vmem:[%s3] sm:$0xf]
    %v80 = vld [vmem:[%s3 + $0x4] sm:$0xf]
    %v81 = vld [vmem:[%s3 + $0x8] sm:$0xf]
    %v82 = vld [vmem:[%s3 + $0xc] sm:$0xf]
    %v83 = vld [vmem:[%s3 + $0x10] sm:$0xf]
    %v84 = vld [vmem:[%s3 + $0x14] sm:$0xf]
    %v85 = vld [vmem:[%s3 + $0x18] sm:$0xf]
    %v86 = vld [vmem:[%s3 + $0x1c] sm:$0xf]
    %v87 = vld [vmem:[%s3 + $0x20] sm:$0xf]
    %v88 = vld [vmem:[%s3 + $0x24] sm:$0xf]
    %v89 = vld [vmem:[%s3 + $0x28] sm:$0xf]
    %v90 = vld [vmem:[%s3 + $0x2c] sm:$0xf]
    %v91 = vld [vmem:[%s3 + $0x30] sm:$0xf]
    %v92 = vld [vmem:[%s3 + $0x34] sm:$0xf]
    %v93 = vld [vmem:[%s3 + $0x38] sm:$0xf]
    %v94 = vld [vmem:[%s3 + $0x3c] sm:$0xf]
    %v95 = vld [vmem:[%s4] sm:$0x1]
    %v97 = vperm.slane %v95, 0
    %v115 = vunpack.c.l.b16 %v79
    %v116 = vunpack.c.l.b16 %v80
    %v117 = vunpack.c.l.b16 %v81
    %v118 = vunpack.c.l.b16 %v82
    %v119 = vunpack.c.l.b16 %v83
    %v120 = vunpack.c.l.b16 %v84
    %v121 = vunpack.c.l.b16 %v85
    %v122 = vunpack.c.l.b16 %v86
    %v123 = vunpack.c.l.b16 %v87
    %v124 = vunpack.c.l.b16 %v88
    %v125 = vunpack.c.l.b16 %v89
    %v126 = vunpack.c.l.b16 %v90
    %v127 = vunpack.c.l.b16 %v91
    %v128 = vunpack.c.l.b16 %v92
    %v129 = vunpack.c.l.b16 %v93
    %v130 = vunpack.c.l.b16 %v94
    %v131 = vpack.c.b16 %v116, %v115
    %v132 = vpack.c.b16 %v118, %v117
    %v133 = vpack.c.b16 %v120, %v119
    %v134 = vpack.c.b16 %v122, %v121
    %v135 = vpack.c.b16 %v124, %v123
    %v136 = vpack.c.b16 %v126, %v125
    %v137 = vpack.c.b16 %v128, %v127
    %v138 = vpack.c.b16 %v130, %v129
    %147 = vmatpush.bf16.msra.mxu0 %v138
    %148 = vmatpush.bf16.msra.mxu0 %v137
    %149 = vmatpush.bf16.msra.mxu0 %v136
    %150 = vmatpush.bf16.msra.mxu0 %v135
    %151 = vmatpush.bf16.msra.mxu0 %v134
    %152 = vmatpush.bf16.msra.mxu0 %v133
    %153 = vmatpush.bf16.msra.mxu0 %v132
    %154 = vmatpush.bf16.msra.mxu0 %v131
    %155 = vmatmul.bf16.gmra.mxu0 %v78
    %v156 = vpop.f32.mrf.mxu0
    %v157 = vadd.f32 %v97, %v156
    %v158 = vpop.f32.mrf.mxu0
    %v159 = vadd.f32 %v97, %v158
    %160 = vdwg.mxu0
    %vm161 = vcmask 523264
    %v162 = vsel %vm161, %v157, 0.0
    %163 = vadd.xlane.f32.xlu0 %v162
    %v164 = vpop.xlane.xlu0 %163
    %v165 = vsel %vm161, %v159, 0.0
    %166 = vadd.xlane.f32.xlu0 %v165
    %v167 = vpop.xlane.xlu0 %166
    %v168 = vrcp.pop 64.0
    %v169 = vmul.f32 64.0, %v168
    %v170 = vsub.f32 1.0, %v169
    %v171 = vmul.f32 %v168, %v170
    %v172 = vadd.f32 %v168, %v171
    %vm173 = vweird.f32 %v168
    %v174 = vsel %vm173, %v168, %v172
    %v175 = vmul.f32 %v164, %v174
    %v176 = vmul.f32 %v167, %v174
    %v177 = vsub.f32 %v157, %v175
    %v178 = vsub.f32 %v159, %v176
    %v179 = vmul.f32 %v177, %v177
    %v180 = vmul.f32 %v178, %v178
    %v181 = vsel %vm161, %v179, 0.0
    %182 = vadd.xlane.f32.xlu0 %v181
    %v183 = vpop.xlane.xlu0 %182
    %v184 = vsel %vm161, %v180, 0.0
    %185 = vadd.xlane.f32.xlu0 %v184
    %v186 = vpop.xlane.xlu0 %185
    %v187 = vmul.f32 %v183, %v174
    %v188 = vmul.f32 %v186, %v174
    %v189 = vadd.f32 %v187, 1e-05
    %v190 = vadd.f32 %v188, 1e-05
    %v191 = vrsqrt.pop %v189
    %v192 = vmul.f32 %v191, %v189
    %v193 = vmul.f32 %v192, %v191
    %v194 = vmul.f32 0.5, %v193
    %v195 = vsub.f32 1.5, %v194
    %v196 = vmul.f32 %v191, %v195
    %vm197 = vweird.f32 %v189
    %vm198 = vweird.f32 %v191
    %vm199 = vmor %vm197, %vm198
    %v200 = vsel %vm199, %v191, %v196
    %v201 = vrsqrt.pop %v190
    %v202 = vmul.f32 %v201, %v190
    %v203 = vmul.f32 %v202, %v201
    %v204 = vmul.f32 0.5, %v203
    %v205 = vsub.f32 1.5, %v204
    %v206 = vmul.f32 %v201, %v205
    %vm207 = vweird.f32 %v190
    %vm208 = vweird.f32 %v201
    %vm209 = vmor %vm207, %vm208
    %v210 = vsel %vm209, %v201, %v206
    %v211 = vmul.f32 %v177, %v200
    %v212 = vmul.f32 %v178, %v210
    %v213 = vpack.c.bf16 %v212, %v211
    %v214 = vld [vmem:[%s5] sm:$0xf]
    %v215 = vld [vmem:[%s5 + $0x4] sm:$0xf]
    %v216 = vld [vmem:[%s5 + $0x8] sm:$0xf]
    %v217 = vld [vmem:[%s5 + $0xc] sm:$0xf]
    %v218 = vld [vmem:[%s5 + $0x10] sm:$0xf]
    %v219 = vld [vmem:[%s5 + $0x14] sm:$0xf]
    %v220 = vld [vmem:[%s5 + $0x18] sm:$0xf]
    %v221 = vld [vmem:[%s5 + $0x1c] sm:$0xf]
    %v222 = vld [vmem:[%s6] sm:$0x1]
    %v224 = vperm.slane %v222, 0
    %v234 = vunpack.c.l.b16 %v214
    %v235 = vunpack.c.l.b16 %v215
    %v236 = vunpack.c.l.b16 %v216
    %v237 = vunpack.c.l.b16 %v217
    %v238 = vunpack.c.l.b16 %v218
    %v239 = vunpack.c.l.b16 %v219
    %v240 = vunpack.c.l.b16 %v220
    %v241 = vunpack.c.l.b16 %v221
    %v242 = vpack.c.b16 %v235, %v234
    %v243 = vpack.c.b16 %v237, %v236
    %v244 = vpack.c.b16 %v239, %v238
    %v245 = vpack.c.b16 %v241, %v240
    %v251 = vsel %vm161, %v213, 0
    %253 = vmatpush.bf16.msra.mxu0 0
    %254 = vmatpush.bf16.msra.mxu0 0
    %255 = vmatpush.bf16.msra.mxu0 0
    %256 = vmatpush.bf16.msra.mxu0 0
    %257 = vmatpush.bf16.msra.mxu0 %v245
    %258 = vmatpush.bf16.msra.mxu0 %v244
    %259 = vmatpush.bf16.msra.mxu0 %v243
    %260 = vmatpush.bf16.msra.mxu0 %v242
    %261 = vmatmul.bf16.gmra.mxu0 %v251
    %v262 = vpop.f32.mrf.mxu0
    %v263 = vadd.f32 %v224, %v262
    %v264 = vpop.f32.mrf.mxu0
    %v265 = vadd.f32 %v224, %v264
    %266 = vdwg.mxu0
    %v267 = vlaneseq
    %v268 = vand.u32 %v267, 127
    %vm269 = vcmp.eq.s32.totalorder %v268, 0
    %vm270 = vcmp.eq.s32.totalorder %v268, 4
    %vm271 = vmor %vm269, %vm270
    %vm272 = vcmp.ge.s32.totalorder %v268, 1
    %vm273 = vcmp.le.s32.totalorder %v268, 3
    %vm274 = vmand %vm272, %vm273
    %vm275 = vcmp.ge.s32.totalorder %v268, 5
    %vm276 = vcmp.le.s32.totalorder %v268, 6
    %vm277 = vmand %vm275, %vm276
    %vm278 = vcmp.ge.s32.totalorder %v268, 7
    %vm279 = vcmp.le.s32.totalorder %v268, 8
    %vm280 = vmand %vm278, %vm279
    %vm281 = vmor %vm274, %vm277
    %vm282 = vmor %vm281, %vm280
    %vm283 = vcmp.lt.s32.totalorder %v268, 9
    %v284 = vsel %vm274, %v263, -1e+30
    %v285 = vsel %vm274, %v265, -1e+30
    %vm286 = vcmask 130048
    %v287 = vsel %vm286, %v284, -inf
    %288 = vmax.xlane.f32.xlu0 %v287
    %v289 = vpop.xlane.xlu0 %288
    %v290 = vsel %vm286, %v285, -inf
    %291 = vmax.xlane.f32.xlu0 %v290
    %v292 = vpop.xlane.xlu0 %291
    %v293 = vsel %vm277, %v263, -1e+30
    %v294 = vsel %vm277, %v265, -1e+30
    %v295 = vsel %vm286, %v293, -inf
    %296 = vmax.xlane.f32.xlu0 %v295
    %v297 = vpop.xlane.xlu0 %296
    %v298 = vsel %vm286, %v294, -inf
    %299 = vmax.xlane.f32.xlu0 %v298
    %v300 = vpop.xlane.xlu0 %299
    %v301 = vsel %vm280, %v263, -1e+30
    %v302 = vsel %vm280, %v265, -1e+30
    %v303 = vsel %vm286, %v301, -inf
    %304 = vmax.xlane.f32.xlu0 %v303
    %v305 = vpop.xlane.xlu0 %304
    %v306 = vsel %vm286, %v302, -inf
    %307 = vmax.xlane.f32.xlu0 %v306
    %v308 = vpop.xlane.xlu0 %307
    %v309 = vsel %vm280, %v305, 0.0
    %v310 = vsel %vm280, %v308, 0.0
    %v311 = vsel %vm277, %v297, %v309
    %v312 = vsel %vm277, %v300, %v310
    %v313 = vsel %vm274, %v289, %v311
    %v314 = vsel %vm274, %v292, %v312
    %v315 = vsub.f32 0.0, %v263
    %v316 = vsub.f32 0.0, %v265
    %v317 = vsub.f32 %v263, %v313
    %v318 = vsub.f32 %v265, %v314
    %v319 = vsel %vm271, %v315, %v317
    %v320 = vsel %vm271, %v316, %v318
    %v321 = vmul.f32 %v319, 1.442695
    %v322 = vpow.pop %v321
    %v323 = vmul.f32 %v320, 1.442695
    %v324 = vpow.pop %v323
    %v325 = vsel %vm282, %v322, 0.0
    %v326 = vsel %vm282, %v324, 0.0
    %v327 = vld [vmem:[%s7] sm:$0xff]
    %v328 = vld [vmem:[%s7 + $0x8] sm:$0xff]
    %v329 = vadd.f32 %v322, 1.0
    %v330 = vadd.f32 %v324, 1.0
    %v331 = vsel %vm271, %v329, 0.0
    %v332 = vsel %vm271, %v330, 0.0
    %v334 = vsel %vm286, %v325, 0
    %v337 = vsel %vm286, %v326, 0
    %339 = vmatpush.msra.mxu0 0.0
    %340 = vmatpush.msra.mxu0 0.0
    %341 = vmatpush.msra.mxu0 0.0
    %342 = vmatpush.msra.mxu0 0.0
    %343 = vmatpush.msra.mxu0 0.0
    %344 = vmatpush.msra.mxu0 0.0
    %345 = vmatpush.msra.mxu0 0.0
    %346 = vmatpush.msra.mxu0 0.0
    %347 = vmatpush.msra.mxu0 0.0
    %348 = vmatpush.msra.mxu0 0.0
    %349 = vmatpush.msra.mxu0 0.0
    %350 = vmatpush.msra.mxu0 0.0
    %351 = vmatpush.msra.mxu0 0.0
    %352 = vmatpush.msra.mxu0 0.0
    %353 = vmatpush.msra.mxu0 %v328
    %354 = vmatpush.msra.mxu0 %v327
    %355 = vmatmul.f32.gmra.mxu0 %v334
    %v356 = vpop.f32.mrf.mxu0
    %v357 = vadd.f32 %v331, %v356
    %358 = vmatmul.f32.gmra.mxu0 %v337
    %v359 = vpop.f32.mrf.mxu0
    %v360 = vadd.f32 %v332, %v359
    %361 = vdwg.mxu0
    %v362 = vsel %vm271, 1.0, %v322
    %v363 = vsel %vm271, 1.0, %v324
    %v364 = vsel %vm283, %v357, 1.0
    %v365 = vsel %vm283, %v360, 1.0
    %v366 = vrcp.pop %v364
    %v367 = vmul.f32 %v364, %v366
    %v368 = vsub.f32 1.0, %v367
    %v369 = vmul.f32 %v366, %v368
    %v370 = vadd.f32 %v366, %v369
    %vm371 = vweird.f32 %v364
    %vm372 = vweird.f32 %v366
    %vm373 = vmor %vm371, %vm372
    %v374 = vsel %vm373, %v366, %v370
    %v375 = vand.u32 2147483647, %v364
    %vm376 = vcmp.eq.f32.partialorder %v375, 8.507059e+37
    %v377 = vand.u32 %v364, 2147483648
    %v378 = vor.u32 1.1754944e-38, %v377
    %v379 = vsel %vm376, %v378, %v374
    %v380 = vmul.f32 %v362, %v379
    %v381 = vrcp.pop %v365
    %v382 = vmul.f32 %v365, %v381
    %v383 = vsub.f32 1.0, %v382
    %v384 = vmul.f32 %v381, %v383
    %v385 = vadd.f32 %v381, %v384
    %vm386 = vweird.f32 %v365
    %vm387 = vweird.f32 %v381
    %vm388 = vmor %vm386, %vm387
    %v389 = vsel %vm388, %v381, %v385
    %v390 = vand.u32 2147483647, %v365
    %vm391 = vcmp.eq.f32.partialorder %v390, 8.507059e+37
    %v392 = vand.u32 %v365, 2147483648
    %v393 = vor.u32 1.1754944e-38, %v392
    %v394 = vsel %vm391, %v393, %v389
    %v395 = vmul.f32 %v363, %v394
    %v396 = vsel %vm283, %v380, 0.0
    %v397 = vsel %vm283, %v395, 0.0
    %398 = vst.msk [vmem:[#allocation2] sm:$0xff] %vm286, %v396
    %399 = vst.msk [vmem:[#allocation2 + $0x8] sm:$0xff] %vm286, %v397
    // Predicated region
    $region34: #{tpu_custom_call.1} parent=1 // pred_check
      _
    $region35: #{tpu_custom_call.1} parent=1 // pred_check_branch
      %401 = sbr.rel (0) target = $region37
    $region36: #{tpu_custom_call.1} parent=1 // pred_region
      %403 = vsyncadd [#allocation3], 0
      %s404 = sshll.u32 [#allocation2], 4
      %s405 = int_to_ptr.vmem [resolvable:$true] %s404
      %s406 = sshll.u32 %s8, 4
      %s407 = int_to_ptr.hbm [resolvable:$true] %s406
      %412 = dma.vmem_to_hbm [thread:$0]  %s405, 256, %s407, [#allocation3], 128, 128, 8
    $region37: #{tpu_custom_call.1} parent=1 // pred_fallthru
      _
    // Predicated region
    $region38: #{tpu_custom_call.1} parent=1 // pred_check
      _
    $region39: #{tpu_custom_call.1} parent=1 // pred_check_branch
      %414 = sbr.rel (0) target = $region41
    $region40: #{tpu_custom_call.1} parent=1 // pred_region
      %416 = dma.done [#allocation3], 256
    $region41: #{tpu_custom_call.1} parent=1 // pred_fallthru
      _
    %417 = vsyncpa [#allocation3], 1

</llo_original>
